<compile_context>
chip_gen: v6e
topology: v6e:2x2x1
jax: 0.10.0
libtpu: 0.0.40
codegen_flags: <defaults>
</compile_context>

<pallas_src>
import functools

import jax
import jax.numpy as jnp
from jax.experimental import pallas as pl
from jax.experimental.pallas import tpu as pltpu


def _cdiv(a, b):
    return (a + b - 1) // b


def _round_up(a, b):
    return _cdiv(a, b) * b


_VMEM_TILE_BUDGET = 24 * 1024 * 1024   # target working set (tiles + temporaries)
_VMEM_LIMIT = 40 * 1024 * 1024         # scoped VMEM limit; safe on v5e/v6e/v7x


def _choose_block_rows(n_rows_padded, h, in_itemsize):
    """Largest multiple-of-8 row tile whose estimated VMEM footprint fits budget."""
    h_pad = _round_up(h, 128)  # lane dim pads to a multiple of 128 in VMEM
    # 2 inputs x 2 pipeline buffers (input dtype) + ~6 live f32 temporaries
    # + the (block_rows, 1) f32 accumulator (lane-padded to 128 -> 512 B/row).
    per_row = h_pad * (4 * in_itemsize + 6 * 4) + 512
    br = (_VMEM_TILE_BUDGET // per_row) // 8 * 8
    br = max(8, br)
    return min(br, n_rows_padded)


def _kld_kernel(xs_ref, xt_ref, o_ref, acc_ref, *, tau, n_rows, block_rows,
                steps_per_core, needs_mask):
    """Accumulate per-row KL(p_teacher || p_student) for one tile of rows.

    xs_ref, xt_ref : (block_rows, H) tiles of student / teacher logits.
    o_ref          : (1, 8, 128) per-core output block (scalar broadcast),
                     written only on the core's last reduction step.
    acc_ref        : (block_rows, 1) f32 running per-row partial sums (scratch).
    """
    i = pl.program_id(1)

    @pl.when(i == 0)
    def _init():
        acc_ref[...] = jnp.zeros_like(acc_ref)

    s = xs_ref[...].astype(jnp.float32)
    t = xt_ref[...].astype(jnp.float32)
    if tau != 1.0:  # static Python check: skip the multiplies when tau == 1
        s = s * (1.0 / tau)
        t = t * (1.0 / tau)

    if needs_mask:
        # Global tile index and row-validity mask: handles the partial last tile
        # and fully out-of-range tiles when (cores x steps) overshoots num_tiles.
        tile_idx = pl.program_id(0) * steps_per_core + i
        rows_left = n_rows - tile_idx * block_rows
        row_ids = jax.lax.broadcasted_iota(jnp.int32, (block_rows, 1), 0)
        valid = row_ids < rows_left
        # Zero padded/garbage rows: KL(uniform || uniform) == 0 exactly, and the
        # select also discards any NaN garbage from out-of-bounds reads.
        s = jnp.where(valid, s, 0.0)
        t = jnp.where(valid, t, 0.0)

    # Student log-sum-exp pieces (numerically stable).
    s_max = jnp.max(s, axis=-1, keepdims=True)
    s_shift = s - s_max
    s_lse = jnp.log(jnp.sum(jnp.exp(s_shift), axis=-1, keepdims=True))

    # Teacher softmax pieces.
    t_max = jnp.max(t, axis=-1, keepdims=True)
    t_shift = t - t_max
    t_exp = jnp.exp(t_shift)
    t_sum = jnp.sum(t_exp, axis=-1, keepdims=True)

    # Algebraic refactor of sum_j p_t * (log p_t - log p_s):
    #   KL_row = (1/t_sum) * sum_j t_exp*(t_shift - s_shift) + (s_lse - log t_sum)
    row_dot = jnp.sum(t_exp * (t_shift - s_shift), axis=-1, keepdims=True)
    kl_row = row_dot * pl.reciprocal(t_sum, approx=False) + (s_lse - jnp.log(t_sum))

    # Cheap per-row VALU accumulate; no per-step cross-sublane reduce.
    acc_ref[...] += kl_row

    @pl.when(i == pl.num_programs(1) - 1)
    def _finalize():
        total = jnp.sum(acc_ref[...])
        o_ref[...] = jnp.broadcast_to(total, o_ref.shape)


def kld_loss(x_student, x_teacher, *, alpha=1.0, tau=1.0):
    """Pallas implementation of KLDLoss.forward with all optional configs = None.

    x_student, x_teacher: [..., H] logits (NCHW in the module). Softmax over the
    last axis; returns a scalar f32 loss. Accepts f32 or bf16 inputs.
    """
    assert x_student.shape == x_teacher.shape
    H = x_student.shape[-1]
    N = x_student.size // H  # number of softmax rows

    xs = x_student.reshape(N, H)
    xt = x_teacher.reshape(N, H)

    # Pad rows to a multiple of 8 (sublane) so block_rows <= array extent always.
    n_pad = _round_up(N, 8)
    if n_pad != N:
        xs = jnp.pad(xs, ((0, n_pad - N), (0, 0)))
        xt = jnp.pad(xt, ((0, n_pad - N), (0, 0)))

    in_itemsize = max(xs.dtype.itemsize, xt.dtype.itemsize)
    br = _choose_block_rows(n_pad, H, in_itemsize)
    num_tiles = _cdiv(n_pad, br)
    num_cores = 2 if num_tiles >= 2 else 1   # v7x has 2 TCs; harmless elsewhere
    steps = _cdiv(num_tiles, num_cores)
    # Mask can be dropped entirely when the (cores x steps x br) grid exactly
    # covers the real rows.
    needs_mask = (num_cores * steps * br) != N

    def in_map(c, i):
        # Clamp so out-of-range grid cells re-read the last tile (masked to 0).
        return (jnp.minimum(c * steps + i, num_tiles - 1), 0)

    kernel = functools.partial(
        _kld_kernel, tau=float(tau), n_rows=N, block_rows=br,
        steps_per_core=steps, needs_mask=needs_mask)

    bytes_accessed = N * H * (x_student.dtype.itemsize + x_teacher.dtype.itemsize)
    partials = pl.pallas_call(
        kernel,
        out_shape=jax.ShapeDtypeStruct((num_cores, 8, 128), jnp.float32),
        grid_spec=pltpu.PrefetchScalarGridSpec(
            num_scalar_prefetch=0,
            grid=(num_cores, steps),
            in_specs=[
                pl.BlockSpec((br, H), in_map),
                pl.BlockSpec((br, H), in_map),
            ],
            out_specs=pl.BlockSpec((1, 8, 128), lambda c, i: (c, 0, 0)),
            scratch_shapes=[pltpu.VMEM((br, 1), jnp.float32)],
        ),
        compiler_params=pltpu.CompilerParams(
            dimension_semantics=("parallel", "arbitrary"),
            vmem_limit_bytes=_VMEM_LIMIT),
        cost_estimate=pl.CostEstimate(
            flops=int(12 * N * H),
            transcendentals=int(2 * N * H + 2 * N),
            bytes_accessed=int(bytes_accessed)),
    )(xs, xt)

    total = jnp.sum(partials[:, 0, 0])
    # KLDivLoss(reduction='sum') / (numel / last_dim) -> sum / N, then * alpha.
    return (alpha * total / N).astype(jnp.float32)


def _reference(x_student, x_teacher, alpha=1.0, tau=1.0):
    """Plain-JAX reference mirroring the PyTorch forward."""
    log_ps = jax.nn.log_softmax(x_student / tau, axis=-1)
    p_t = jax.nn.softmax(x_teacher / tau, axis=-1)
    kl = p_t * (jnp.log(p_t) - log_ps)
    n_rows = x_student.size // x_student.shape[-1]
    return alpha * jnp.sum(kl) / n_rows


if __name__ == "__main__":
    key = jax.random.PRNGKey(0)
    k1, k2 = jax.random.split(key)

    # Primary test: matches the module's NCHW usage at small shapes.
    B, C, W, H = 2, 4, 16, 16
    xs = jax.random.normal(k1, (B, C, W, H), dtype=jnp.float32)
    xt = jax.random.normal(k2, (B, C, W, H), dtype=jnp.float32)
    # gt / n_iter are unused when resize/shuffle/warmup/earlydecay configs are None.
    loss = jax.block_until_ready(kld_loss(xs, xt, alpha=1.0, tau=1.0))
    ref = _reference(xs, xt, alpha=1.0, tau=1.0)
    assert jnp.allclose(loss, ref, rtol=1e-5, atol=1e-5), (loss, ref)

    # Secondary test: multi-tile grid, partial (masked) last tile, 2-way core split.
    k3, k4 = jax.random.split(k1)
    xs2 = jax.random.normal(k3, (2, 8, 400, 20), dtype=jnp.float32)
    xt2 = jax.random.normal(k4, (2, 8, 400, 20), dtype=jnp.float32)
    loss2 = jax.block_until_ready(kld_loss(xs2, xt2, alpha=1.0, tau=1.0))
    ref2 = _reference(xs2, xt2, alpha=1.0, tau=1.0)
    assert jnp.allclose(loss2, ref2, rtol=1e-5, atol=1e-5), (loss2, ref2)

    # Third test: bf16 inputs (half the HBM traffic), tau != 1, alpha != 1.
    xs3 = xs.astype(jnp.bfloat16)
    xt3 = xt.astype(jnp.bfloat16)
    loss3 = jax.block_until_ready(kld_loss(xs3, xt3, alpha=0.5, tau=2.0))
    ref3 = _reference(xs3.astype(jnp.float32), xt3.astype(jnp.float32),
                      alpha=0.5, tau=2.0)
    assert jnp.allclose(loss3, ref3, rtol=1e-5, atol=1e-5), (loss3, ref3)

    print("KERNEL_OK")
</pallas_src>

<mosaic_0001>
module attributes {stable_mosaic.version = 11 : i64} {
  func.func @_kld_kernel(%arg0: i32, %arg1: i32, %arg2: memref<128x16xf32, #tpu.memory_space<vmem>>, %arg3: memref<128x16xf32, #tpu.memory_space<vmem>>, %arg4: memref<1x8x128xf32, #tpu.memory_space<vmem>>, %arg5: memref<128x1xf32, #tpu.memory_space<vmem>>) attributes {dimension_semantics = [#tpu.dimension_semantics<parallel>, #tpu.dimension_semantics<arbitrary>], iteration_bounds = array<i64: 1, 1>, scalar_prefetch = 0 : i64, scratch_operands = 1 : i64, tpu.core_type = #tpu.core_type<tc>, window_params = [{transform_indices = @transform_0, window_bounds = array<i64: 128, 16>}, {transform_indices = @transform_1, window_bounds = array<i64: 128, 16>}, {transform_indices = @transform_2, window_bounds = array<i64: 1, 8, 128>}]} {
    %c0_i32 = arith.constant 0 : i32
    %0 = arith.cmpi eq, %arg1, %c0_i32 : i32
    %1 = arith.extui %0 : i1 to i32
    %c0_i32_0 = arith.constant 0 : i32
    %2 = arith.cmpi ne, %1, %c0_i32_0 : i32
    scf.if %2 {
      %cst_14 = arith.constant 0.000000e+00 : f32
      %35 = vector.broadcast %cst_14 : f32 to vector<128x1xf32>
      %c0_15 = arith.constant 0 : index
      %c0_16 = arith.constant 0 : index
      %36 = vector.load %arg5[%c0_15, %c0_16] : memref<128x1xf32, #tpu.memory_space<vmem>>, vector<128x1xf32>
      tpu.vector_store %arg5[%c0_15, %c0_16], %35 {strides = array<i32>} : memref<128x1xf32, #tpu.memory_space<vmem>>, vector<128x1xf32>,
    } else {
    }
    %c0 = arith.constant 0 : index
    %c0_1 = arith.constant 0 : index
    %3 = vector.load %arg2[%c0, %c0_1] : memref<128x16xf32, #tpu.memory_space<vmem>>, vector<128x16xf32>
    %c0_2 = arith.constant 0 : index
    %c0_3 = arith.constant 0 : index
    %4 = vector.load %arg3[%c0_2, %c0_3] : memref<128x16xf32, #tpu.memory_space<vmem>>, vector<128x16xf32>
    %cst = arith.constant dense<0xFF800000> : vector<128xf32>
    %5 = vector.multi_reduction <maximumf>, %3, %cst [1] : vector<128x16xf32> to vector<128xf32>
    %6 = vector.shape_cast %5 : vector<128xf32> to vector<128x1xf32>
    %7 = vector.broadcast %6 : vector<128x1xf32> to vector<128x16xf32>
    %8 = arith.subf %3, %7 : vector<128x16xf32>
    %9 = math.exp %8 : vector<128x16xf32>
    %cst_4 = arith.constant dense<0.000000e+00> : vector<128xf32>
    %10 = vector.multi_reduction <add>, %9, %cst_4 [1] : vector<128x16xf32> to vector<128xf32>
    %11 = vector.shape_cast %10 : vector<128xf32> to vector<128x1xf32>
    %12 = math.log %11 : vector<128x1xf32>
    %cst_5 = arith.constant dense<0xFF800000> : vector<128xf32>
    %13 = vector.multi_reduction <maximumf>, %4, %cst_5 [1] : vector<128x16xf32> to vector<128xf32>
    %14 = vector.shape_cast %13 : vector<128xf32> to vector<128x1xf32>
    %15 = vector.broadcast %14 : vector<128x1xf32> to vector<128x16xf32>
    %16 = arith.subf %4, %15 : vector<128x16xf32>
    %17 = math.exp %16 : vector<128x16xf32>
    %cst_6 = arith.constant dense<0.000000e+00> : vector<128xf32>
    %18 = vector.multi_reduction <add>, %17, %cst_6 [1] : vector<128x16xf32> to vector<128xf32>
    %19 = vector.shape_cast %18 : vector<128xf32> to vector<128x1xf32>
    %20 = arith.subf %16, %8 : vector<128x16xf32>
    %21 = arith.mulf %17, %20 : vector<128x16xf32>
    %cst_7 = arith.constant dense<0.000000e+00> : vector<128xf32>
    %22 = vector.multi_reduction <add>, %21, %cst_7 [1] : vector<128x16xf32> to vector<128xf32>
    %23 = vector.shape_cast %22 : vector<128xf32> to vector<128x1xf32>
    %24 = tpu.reciprocal %19 : vector<128x1xf32> -> vector<128x1xf32>
    %25 = arith.mulf %23, %24 : vector<128x1xf32>
    %26 = math.log %19 : vector<128x1xf32>
    %27 = arith.subf %12, %26 : vector<128x1xf32>
    %28 = arith.addf %25, %27 : vector<128x1xf32>
    %c0_8 = arith.constant 0 : index
    %c0_9 = arith.constant 0 : index
    %29 = vector.load %arg5[%c0_8, %c0_9] : memref<128x1xf32, #tpu.memory_space<vmem>>, vector<128x1xf32>
    %30 = arith.addf %29, %28 : vector<128x1xf32>
    %c0_10 = arith.constant 0 : index
    %c0_11 = arith.constant 0 : index
    %31 = vector.load %arg5[%c0_10, %c0_11] : memref<128x1xf32, #tpu.memory_space<vmem>>, vector<128x1xf32>
    tpu.vector_store %arg5[%c0_10, %c0_11], %30 {strides = array<i32>} : memref<128x1xf32, #tpu.memory_space<vmem>>, vector<128x1xf32>,
    %c0_i32_12 = arith.constant 0 : i32
    %32 = arith.cmpi eq, %arg1, %c0_i32_12 : i32
    %33 = arith.extui %32 : i1 to i32
    %c0_i32_13 = arith.constant 0 : i32
    %34 = arith.cmpi ne, %33, %c0_i32_13 : i32
    scf.if %34 {
      %c0_14 = arith.constant 0 : index
      %c0_15 = arith.constant 0 : index
      %35 = vector.load %arg5[%c0_14, %c0_15] : memref<128x1xf32, #tpu.memory_space<vmem>>, vector<128x1xf32>
      %36 = vector.shape_cast %35 : vector<128x1xf32> to vector<1x128x1xf32>
      %cst_16 = arith.constant dense<0.000000e+00> : vector<1xf32>
      %37 = vector.multi_reduction <add>, %36, %cst_16 [1, 2] : vector<1x128x1xf32> to vector<1xf32>
      %38 = vector.shape_cast %37 : vector<1xf32> to vector<1x1x1xf32>
      %39 = vector.extract %38[0, 0, 0] : f32 from vector<1x1x1xf32>
      %40 = vector.broadcast %39 : f32 to vector<1x8x128xf32>
      %c0_17 = arith.constant 0 : index
      %c0_18 = arith.constant 0 : index
      %c0_19 = arith.constant 0 : index
      %41 = vector.load %arg4[%c0_17, %c0_18, %c0_19] : memref<1x8x128xf32, #tpu.memory_space<vmem>>, vector<1x8x128xf32>
      tpu.vector_store %arg4[%c0_17, %c0_18, %c0_19], %40 {strides = array<i32>} : memref<1x8x128xf32, #tpu.memory_space<vmem>>, vector<1x8x128xf32>,
    } else {
    }
    return
  }
  func.func @transform_0(%arg0: i32, %arg1: i32) -> (i32, i32) {
    %c1_i32 = arith.constant 1 : i32
    %0 = arith.muli %arg0, %c1_i32 : i32
    %1 = arith.addi %0, %arg1 : i32
    %c0_i32 = arith.constant 0 : i32
    %2 = arith.minsi %1, %c0_i32 : i32
    %c0_i32_0 = arith.constant 0 : i32
    %c0_i32_1 = arith.constant 0 : i32
    return %2, %c0_i32_0 : i32, i32
  }
  func.func @transform_1(%arg0: i32, %arg1: i32) -> (i32, i32) {
    %c1_i32 = arith.constant 1 : i32
    %0 = arith.muli %arg0, %c1_i32 : i32
    %1 = arith.addi %0, %arg1 : i32
    %c0_i32 = arith.constant 0 : i32
    %2 = arith.minsi %1, %c0_i32 : i32
    %c0_i32_0 = arith.constant 0 : i32
    %c0_i32_1 = arith.constant 0 : i32
    return %2, %c0_i32_0 : i32, i32
  }
  func.func @transform_2(%arg0: i32, %arg1: i32) -> (i32, i32, i32) {
    %c0_i32 = arith.constant 0 : i32
    %c0_i32_0 = arith.constant 0 : i32
    %c0_i32_1 = arith.constant 0 : i32
    return %arg0, %c0_i32, %c0_i32_0 : i32, i32, i32
  }
}

</mosaic_0001>

<llo_original>
// kernel: tpu_custom_call.1
$region0: #{tpu_custom_call.1}
  #allocation0 [shape = 'u32[]', space=smem, size = 0x4, offset = 0x4, fixed_abs, tag = 'smem constant byte address 0x4 - core index']
  #allocation1 [shape = 'u32[144,128]{1,0:T(1,128)}', space=vmem, size = 0x12000, scoped, tag = 'internal scratch']
  #allocation2 [shape = 'f32[128,1]{1,0:T(8,128)}', space=vmem, size = 0x10000, scoped, tag = 'scratch operand']
  %s0 = inlined_call_operand.vmem [shape: f32[128,16], index: 0, kind: input, shape index: {}]
  %s1 = inlined_call_operand.vmem [shape: f32[128,16], index: 1, kind: input, shape index: {}]
  %s2 = inlined_call_operand.hbm [shape: f32[1,8,128], index: 2, kind: output, shape index: {}]
  %s3 = sld [smem:[#allocation0]]
  $region26: #{tpu_custom_call.1} parent=0
    _
  %s5 = ssub.s32 1, %s3
  %s6 = scalar_select 0, %s5, %s3
  $region1: #{tpu_custom_call.1} parent=0
    #allocation3 [shape = 'u8[4096]{0}', space=vmem, size = 0x1000, scoped, tag = 'output window, operand 0, single buffered']
    #allocation4 [shape = 's32[1]{0}', space=sflag, size = 0x4, scoped, tag = 'scoped memory for tpu_custom_call.1']
    %7 = vsyncpa [#allocation4], 0
    // Predicated region
    $region2: #{tpu_custom_call.1} parent=1 // pred_check
      _
    $region3: #{tpu_custom_call.1} parent=1 // pred_check_branch
      %9 = sbr.rel (0) target = $region5
    $region4: #{tpu_custom_call.1} parent=1 // pred_region
      %s10 = sadd.s32 0, 0
      %p11 = scmp.lt.s32.totalorder %s10, 0
      %s12 = scalar_select %p11, %s10, 0
      %s13 = smul.u32 16, %s12
      %p14 = scmp.lt.s32.totalorder %s13, 15
      %s15 = scalar_select %p14, %s13, 15
      %s16 = smul.addr %s15, 8
      %s17 = scalar_lea.vmem %s0, %s16
      %s18 = sadd.s32 0, 0
      %p19 = scmp.lt.s32.totalorder %s18, 0
      %s20 = scalar_select %p19, %s18, 0
      %s21 = smul.u32 16, %s20
    $region5: #{tpu_custom_call.1} parent=1 // pred_fallthru
      _
    // Predicated region
    $region6: #{tpu_custom_call.1} parent=1 // pred_check
      _
    $region7: #{tpu_custom_call.1} parent=1 // pred_check_branch
      %23 = sbr.rel (0) target = $region9
    $region8: #{tpu_custom_call.1} parent=1 // pred_region
      %s24 = sadd.s32 0, 0
      %p25 = scmp.lt.s32.totalorder %s24, 0
      %s26 = scalar_select %p25, %s24, 0
      %s27 = smul.u32 16, %s26
      %p28 = scmp.lt.s32.totalorder %s27, 15
      %s29 = scalar_select %p28, %s27, 15
      %s30 = smul.addr %s29, 8
      %s31 = scalar_lea.vmem %s1, %s30
      %s32 = sadd.s32 0, 0
      %p33 = scmp.lt.s32.totalorder %s32, 0
      %s34 = scalar_select %p33, %s32, 0
      %s35 = smul.u32 16, %s34
    $region9: #{tpu_custom_call.1} parent=1 // pred_fallthru
      _
    %s36 = sadd.s32 0, 0
    %p37 = scmp.lt.s32.totalorder %s36, 0
    %s38 = scalar_select %p37, %s36, 0
    %s39 = smul.u32 16, %s38
    %p40 = scmp.lt.s32.totalorder %s39, 15
    %s41 = scalar_select %p40, %s39, 15
    %s42 = smul.addr %s41, 8
    %s43 = scalar_lea.vmem %s0, %s42
    %s44 = sadd.s32 0, 0
    %p45 = scmp.lt.s32.totalorder %s44, 0
    %s46 = scalar_select %p45, %s44, 0
    %s47 = smul.u32 16, %s46
    %p48 = scmp.lt.s32.totalorder %s47, 15
    %s49 = scalar_select %p48, %s47, 15
    %s50 = smul.addr %s49, 8
    %s51 = scalar_lea.vmem %s1, %s50
    %s52 = sadd.s32 0, 0
    %p53 = scmp.lt.s32.totalorder %s52, 0
    %s54 = scalar_select %p53, %s52, 0
    %s55 = smul.u32 16, %s54
    %p56 = scmp.lt.s32.totalorder %s55, 15
    %s57 = scalar_select %p56, %s55, 15
    %s58 = smul.addr %s57, 8
    %s59 = scalar_lea.vmem %s0, %s58
    %s60 = sadd.s32 0, 0
    %p61 = scmp.lt.s32.totalorder %s60, 0
    %s62 = scalar_select %p61, %s60, 0
    %s63 = smul.u32 16, %s62
    %s64 = sadd.s32 0, 0
    %p65 = scmp.lt.s32.totalorder %s64, 0
    %s66 = scalar_select %p65, %s64, 0
    %s67 = smul.u32 16, %s66
    %p68 = scmp.lt.s32.totalorder %s67, 15
    %s69 = scalar_select %p68, %s67, 15
    %s70 = smul.addr %s69, 8
    %s71 = scalar_lea.vmem %s1, %s70
    %s72 = sadd.s32 0, 0
    %p73 = scmp.lt.s32.totalorder %s72, 0
    %s74 = scalar_select %p73, %s72, 0
    %s75 = smul.u32 16, %s74
    %p76 = scmp.eq.s32.totalorder 0, 0
    // Predicated region
    $region10: #{tpu_custom_call.1} parent=1 // pred_check
      %p77 = pneg %p76
    $region11: #{tpu_custom_call.1} parent=1 // pred_check_branch
      %79 = sbr.rel (%p77) target = $region13
    $region12: #{tpu_custom_call.1} parent=1 // pred_region
      %vm80 = vcmask 7168
      %81 = vst.msk [vmem:[#allocation2] sm:$0xff] %vm80, 0.0
      %82 = vst.msk [vmem:[#allocation2 + $0x8] sm:$0xff] %vm80, 0.0
      %83 = vst.msk [vmem:[#allocation2 + $0x10] sm:$0xff] %vm80, 0.0
      %84 = vst.msk [vmem:[#allocation2 + $0x18] sm:$0xff] %vm80, 0.0
      %85 = vst.msk [vmem:[#allocation2 + $0x20] sm:$0xff] %vm80, 0.0
      %86 = vst.msk [vmem:[#allocation2 + $0x28] sm:$0xff] %vm80, 0.0
      %87 = vst.msk [vmem:[#allocation2 + $0x30] sm:$0xff] %vm80, 0.0
      %88 = vst.msk [vmem:[#allocation2 + $0x38] sm:$0xff] %vm80, 0.0
      %89 = vst.msk [vmem:[#allocation2 + $0x40] sm:$0xff] %vm80, 0.0
      %90 = vst.msk [vmem:[#allocation2 + $0x48] sm:$0xff] %vm80, 0.0
      %91 = vst.msk [vmem:[#allocation2 + $0x50] sm:$0xff] %vm80, 0.0
      %92 = vst.msk [vmem:[#allocation2 + $0x58] sm:$0xff] %vm80, 0.0
      %93 = vst.msk [vmem:[#allocation2 + $0x60] sm:$0xff] %vm80, 0.0
      %94 = vst.msk [vmem:[#allocation2 + $0x68] sm:$0xff] %vm80, 0.0
      %95 = vst.msk [vmem:[#allocation2 + $0x70] sm:$0xff] %vm80, 0.0
      %96 = vst.msk [vmem:[#allocation2 + $0x78] sm:$0xff] %vm80, 0.0
    $region13: #{tpu_custom_call.1} parent=1 // pred_fallthru
      _
    %v97 = vld [vmem:[%s59] sm:$0xff]
    %v98 = vld [vmem:[%s59 + $0x8] sm:$0xff]
    %v99 = vld [vmem:[%s59 + $0x10] sm:$0xff]
    %v100 = vld [vmem:[%s59 + $0x18] sm:$0xff]
    %v101 = vld [vmem:[%s59 + $0x20] sm:$0xff]
    %v102 = vld [vmem:[%s59 + $0x28] sm:$0xff]
    %v103 = vld [vmem:[%s59 + $0x30] sm:$0xff]
    %v104 = vld [vmem:[%s59 + $0x38] sm:$0xff]
    %v105 = vld [vmem:[%s59 + $0x40] sm:$0xff]
    %v106 = vld [vmem:[%s59 + $0x48] sm:$0xff]
    %v107 = vld [vmem:[%s59 + $0x50] sm:$0xff]
    %v108 = vld [vmem:[%s59 + $0x58] sm:$0xff]
    %v109 = vld [vmem:[%s59 + $0x60] sm:$0xff]
    %v110 = vld [vmem:[%s59 + $0x68] sm:$0xff]
    %v111 = vld [vmem:[%s59 + $0x70] sm:$0xff]
    %v112 = vld [vmem:[%s59 + $0x78] sm:$0xff]
    %v113 = vld [vmem:[%s71] sm:$0xff]
    %v114 = vld [vmem:[%s71 + $0x8] sm:$0xff]
    %v115 = vld [vmem:[%s71 + $0x10] sm:$0xff]
    %v116 = vld [vmem:[%s71 + $0x18] sm:$0xff]
    %v117 = vld [vmem:[%s71 + $0x20] sm:$0xff]
    %v118 = vld [vmem:[%s71 + $0x28] sm:$0xff]
    %v119 = vld [vmem:[%s71 + $0x30] sm:$0xff]
    %v120 = vld [vmem:[%s71 + $0x38] sm:$0xff]
    %v121 = vld [vmem:[%s71 + $0x40] sm:$0xff]
    %v122 = vld [vmem:[%s71 + $0x48] sm:$0xff]
    %v123 = vld [vmem:[%s71 + $0x50] sm:$0xff]
    %v124 = vld [vmem:[%s71 + $0x58] sm:$0xff]
    %v125 = vld [vmem:[%s71 + $0x60] sm:$0xff]
    %v126 = vld [vmem:[%s71 + $0x68] sm:$0xff]
    %v127 = vld [vmem:[%s71 + $0x70] sm:$0xff]
    %v128 = vld [vmem:[%s71 + $0x78] sm:$0xff]
    %vm129 = vcmask 130048
    %v130 = vsel %vm129, %v97, -inf
    %131 = vmax.xlane.f32.xlu0 %v130
    %v132 = vpop.xlane.xlu0 %131
    %v133 = vsel %vm129, %v98, -inf
    %134 = vmax.xlane.f32.xlu0 %v133
    %v135 = vpop.xlane.xlu0 %134
    %v136 = vsel %vm129, %v99, -inf
    %137 = vmax.xlane.f32.xlu0 %v136
    %v138 = vpop.xlane.xlu0 %137
    %v139 = vsel %vm129, %v100, -inf
    %140 = vmax.xlane.f32.xlu0 %v139
    %v141 = vpop.xlane.xlu0 %140
    %v142 = vsel %vm129, %v101, -inf
    %143 = vmax.xlane.f32.xlu0 %v142
    %v144 = vpop.xlane.xlu0 %143
    %v145 = vsel %vm129, %v102, -inf
    %146 = vmax.xlane.f32.xlu0 %v145
    %v147 = vpop.xlane.xlu0 %146
    %v148 = vsel %vm129, %v103, -inf
    %149 = vmax.xlane.f32.xlu0 %v148
    %v150 = vpop.xlane.xlu0 %149
    %v151 = vsel %vm129, %v104, -inf
    %152 = vmax.xlane.f32.xlu0 %v151
    %v153 = vpop.xlane.xlu0 %152
    %v154 = vsel %vm129, %v105, -inf
    %155 = vmax.xlane.f32.xlu0 %v154
    %v156 = vpop.xlane.xlu0 %155
    %v157 = vsel %vm129, %v106, -inf
    %158 = vmax.xlane.f32.xlu0 %v157
    %v159 = vpop.xlane.xlu0 %158
    %v160 = vsel %vm129, %v107, -inf
    %161 = vmax.xlane.f32.xlu0 %v160
    %v162 = vpop.xlane.xlu0 %161
    %v163 = vsel %vm129, %v108, -inf
    %164 = vmax.xlane.f32.xlu0 %v163
    %v165 = vpop.xlane.xlu0 %164
    %v166 = vsel %vm129, %v109, -inf
    %167 = vmax.xlane.f32.xlu0 %v166
    %v168 = vpop.xlane.xlu0 %167
    %v169 = vsel %vm129, %v110, -inf
    %170 = vmax.xlane.f32.xlu0 %v169
    %v171 = vpop.xlane.xlu0 %170
    %v172 = vsel %vm129, %v111, -inf
    %173 = vmax.xlane.f32.xlu0 %v172
    %v174 = vpop.xlane.xlu0 %173
    %v175 = vsel %vm129, %v112, -inf
    %176 = vmax.xlane.f32.xlu0 %v175
    %v177 = vpop.xlane.xlu0 %176
    %v178 = vsub.f32 %v97, %v132
    %v179 = vsub.f32 %v98, %v135
    %v180 = vsub.f32 %v99, %v138
    %v181 = vsub.f32 %v100, %v141
    %v182 = vsub.f32 %v101, %v144
    %v183 = vsub.f32 %v102, %v147
    %v184 = vsub.f32 %v103, %v150
    %v185 = vsub.f32 %v104, %v153
    %v186 = vsub.f32 %v105, %v156
    %v187 = vsub.f32 %v106, %v159
    %v188 = vsub.f32 %v107, %v162
    %v189 = vsub.f32 %v108, %v165
    %v190 = vsub.f32 %v109, %v168
    %v191 = vsub.f32 %v110, %v171
    %v192 = vsub.f32 %v111, %v174
    %v193 = vsub.f32 %v112, %v177
    %v194 = vmul.f32 %v178, 1.442695
    %v195 = vpow.pop %v194
    %v196 = vmul.f32 %v179, 1.442695
    %v197 = vpow.pop %v196
    %v198 = vmul.f32 %v180, 1.442695
    %v199 = vpow.pop %v198
    %v200 = vmul.f32 %v181, 1.442695
    %v201 = vpow.pop %v200
    %v202 = vmul.f32 %v182, 1.442695
    %v203 = vpow.pop %v202
    %v204 = vmul.f32 %v183, 1.442695
    %v205 = vpow.pop %v204
    %v206 = vmul.f32 %v184, 1.442695
    %v207 = vpow.pop %v206
    %v208 = vmul.f32 %v185, 1.442695
    %v209 = vpow.pop %v208
    %v210 = vmul.f32 %v186, 1.442695
    %v211 = vpow.pop %v210
    %v212 = vmul.f32 %v187, 1.442695
    %v213 = vpow.pop %v212
    %v214 = vmul.f32 %v188, 1.442695
    %v215 = vpow.pop %v214
    %v216 = vmul.f32 %v189, 1.442695
    %v217 = vpow.pop %v216
    %v218 = vmul.f32 %v190, 1.442695
    %v219 = vpow.pop %v218
    %v220 = vmul.f32 %v191, 1.442695
    %v221 = vpow.pop %v220
    %v222 = vmul.f32 %v192, 1.442695
    %v223 = vpow.pop %v222
    %v224 = vmul.f32 %v193, 1.442695
    %v225 = vpow.pop %v224
    %v226 = vsel %vm129, %v195, 0.0
    %227 = vadd.xlane.f32.xlu0 %v226
    %v228 = vpop.xlane.xlu0 %227
    %v229 = vsel %vm129, %v197, 0.0
    %230 = vadd.xlane.f32.xlu0 %v229
    %v231 = vpop.xlane.xlu0 %230
    %v232 = vsel %vm129, %v199, 0.0
    %233 = vadd.xlane.f32.xlu0 %v232
    %v234 = vpop.xlane.xlu0 %233
    %v235 = vsel %vm129, %v201, 0.0
    %236 = vadd.xlane.f32.xlu0 %v235
    %v237 = vpop.xlane.xlu0 %236
    %v238 = vsel %vm129, %v203, 0.0
    %239 = vadd.xlane.f32.xlu0 %v238
    %v240 = vpop.xlane.xlu0 %239
    %v241 = vsel %vm129, %v205, 0.0
    %242 = vadd.xlane.f32.xlu0 %v241
    %v243 = vpop.xlane.xlu0 %242
    %v244 = vsel %vm129, %v207, 0.0
    %245 = vadd.xlane.f32.xlu0 %v244
    %v246 = vpop.xlane.xlu0 %245
    %v247 = vsel %vm129, %v209, 0.0
    %248 = vadd.xlane.f32.xlu0 %v247
    %v249 = vpop.xlane.xlu0 %248
    %v250 = vsel %vm129, %v211, 0.0
    %251 = vadd.xlane.f32.xlu0 %v250
    %v252 = vpop.xlane.xlu0 %251
    %v253 = vsel %vm129, %v213, 0.0
    %254 = vadd.xlane.f32.xlu0 %v253
    %v255 = vpop.xlane.xlu0 %254
    %v256 = vsel %vm129, %v215, 0.0
    %257 = vadd.xlane.f32.xlu0 %v256
    %v258 = vpop.xlane.xlu0 %257
    %v259 = vsel %vm129, %v217, 0.0
    %260 = vadd.xlane.f32.xlu0 %v259
    %v261 = vpop.xlane.xlu0 %260
    %v262 = vsel %vm129, %v219, 0.0
    %263 = vadd.xlane.f32.xlu0 %v262
    %v264 = vpop.xlane.xlu0 %263
    %v265 = vsel %vm129, %v221, 0.0
    %266 = vadd.xlane.f32.xlu0 %v265
    %v267 = vpop.xlane.xlu0 %266
    %v268 = vsel %vm129, %v223, 0.0
    %269 = vadd.xlane.f32.xlu0 %v268
    %v270 = vpop.xlane.xlu0 %269
    %v271 = vsel %vm129, %v225, 0.0
    %272 = vadd.xlane.f32.xlu0 %v271
    %v273 = vpop.xlane.xlu0 %272
    %v274 = vlog2.pop %v228
    %v275 = vmul.f32 %v274, 0.6931472
    %v276 = vlog2.pop %v231
    %v277 = vmul.f32 %v276, 0.6931472
    %v278 = vlog2.pop %v234
    %v279 = vmul.f32 %v278, 0.6931472
    %v280 = vlog2.pop %v237
    %v281 = vmul.f32 %v280, 0.6931472
    %v282 = vlog2.pop %v240
    %v283 = vmul.f32 %v282, 0.6931472
    %v284 = vlog2.pop %v243
    %v285 = vmul.f32 %v284, 0.6931472
    %v286 = vlog2.pop %v246
    %v287 = vmul.f32 %v286, 0.6931472
    %v288 = vlog2.pop %v249
    %v289 = vmul.f32 %v288, 0.6931472
    %v290 = vlog2.pop %v252
    %v291 = vmul.f32 %v290, 0.6931472
    %v292 = vlog2.pop %v255
    %v293 = vmul.f32 %v292, 0.6931472
    %v294 = vlog2.pop %v258
    %v295 = vmul.f32 %v294, 0.6931472
    %v296 = vlog2.pop %v261
    %v297 = vmul.f32 %v296, 0.6931472
    %v298 = vlog2.pop %v264
    %v299 = vmul.f32 %v298, 0.6931472
    %v300 = vlog2.pop %v267
    %v301 = vmul.f32 %v300, 0.6931472
    %v302 = vlog2.pop %v270
    %v303 = vmul.f32 %v302, 0.6931472
    %v304 = vlog2.pop %v273
    %v305 = vmul.f32 %v304, 0.6931472
    %v306 = vsel %vm129, %v113, -inf
    %307 = vmax.xlane.f32.xlu0 %v306
    %v308 = vpop.xlane.xlu0 %307
    %v309 = vsel %vm129, %v114, -inf
    %310 = vmax.xlane.f32.xlu0 %v309
    %v311 = vpop.xlane.xlu0 %310
    %v312 = vsel %vm129, %v115, -inf
    %313 = vmax.xlane.f32.xlu0 %v312
    %v314 = vpop.xlane.xlu0 %313
    %v315 = vsel %vm129, %v116, -inf
    %316 = vmax.xlane.f32.xlu0 %v315
    %v317 = vpop.xlane.xlu0 %316
    %v318 = vsel %vm129, %v117, -inf
    %319 = vmax.xlane.f32.xlu0 %v318
    %v320 = vpop.xlane.xlu0 %319
    %v321 = vsel %vm129, %v118, -inf
    %322 = vmax.xlane.f32.xlu0 %v321
    %v323 = vpop.xlane.xlu0 %322
    %v324 = vsel %vm129, %v119, -inf
    %325 = vmax.xlane.f32.xlu0 %v324
    %v326 = vpop.xlane.xlu0 %325
    %v327 = vsel %vm129, %v120, -inf
    %328 = vmax.xlane.f32.xlu0 %v327
    %v329 = vpop.xlane.xlu0 %328
    %v330 = vsel %vm129, %v121, -inf
    %331 = vmax.xlane.f32.xlu0 %v330
    %v332 = vpop.xlane.xlu0 %331
    %v333 = vsel %vm129, %v122, -inf
    %334 = vmax.xlane.f32.xlu0 %v333
    %v335 = vpop.xlane.xlu0 %334
    %v336 = vsel %vm129, %v123, -inf
    %337 = vmax.xlane.f32.xlu0 %v336
    %v338 = vpop.xlane.xlu0 %337
    %v339 = vsel %vm129, %v124, -inf
    %340 = vmax.xlane.f32.xlu0 %v339
    %v341 = vpop.xlane.xlu0 %340
    %v342 = vsel %vm129, %v125, -inf
    %343 = vmax.xlane.f32.xlu0 %v342
    %v344 = vpop.xlane.xlu0 %343
    %v345 = vsel %vm129, %v126, -inf
    %346 = vmax.xlane.f32.xlu0 %v345
    %v347 = vpop.xlane.xlu0 %346
    %v348 = vsel %vm129, %v127, -inf
    %349 = vmax.xlane.f32.xlu0 %v348
    %v350 = vpop.xlane.xlu0 %349
    %v351 = vsel %vm129, %v128, -inf
    %352 = vmax.xlane.f32.xlu0 %v351
    %v353 = vpop.xlane.xlu0 %352
    %v354 = vsub.f32 %v113, %v308
    %v355 = vsub.f32 %v114, %v311
    %v356 = vsub.f32 %v115, %v314
    %v357 = vsub.f32 %v116, %v317
    %v358 = vsub.f32 %v117, %v320
    %v359 = vsub.f32 %v118, %v323
    %v360 = vsub.f32 %v119, %v326
    %v361 = vsub.f32 %v120, %v329
    %v362 = vsub.f32 %v121, %v332
    %v363 = vsub.f32 %v122, %v335
    %v364 = vsub.f32 %v123, %v338
    %v365 = vsub.f32 %v124, %v341
    %v366 = vsub.f32 %v125, %v344
    %v367 = vsub.f32 %v126, %v347
    %v368 = vsub.f32 %v127, %v350
    %v369 = vsub.f32 %v128, %v353
    %v370 = vmul.f32 %v354, 1.442695
    %v371 = vpow.pop %v370
    %v372 = vmul.f32 %v355, 1.442695
    %v373 = vpow.pop %v372
    %v374 = vmul.f32 %v356, 1.442695
    %v375 = vpow.pop %v374
    %v376 = vmul.f32 %v357, 1.442695
    %v377 = vpow.pop %v376
    %v378 = vmul.f32 %v358, 1.442695
    %v379 = vpow.pop %v378
    %v380 = vmul.f32 %v359, 1.442695
    %v381 = vpow.pop %v380
    %v382 = vmul.f32 %v360, 1.442695
    %v383 = vpow.pop %v382
    %v384 = vmul.f32 %v361, 1.442695
    %v385 = vpow.pop %v384
    %v386 = vmul.f32 %v362, 1.442695
    %v387 = vpow.pop %v386
    %v388 = vmul.f32 %v363, 1.442695
    %v389 = vpow.pop %v388
    %v390 = vmul.f32 %v364, 1.442695
    %v391 = vpow.pop %v390
    %v392 = vmul.f32 %v365, 1.442695
    %v393 = vpow.pop %v392
    %v394 = vmul.f32 %v366, 1.442695
    %v395 = vpow.pop %v394
    %v396 = vmul.f32 %v367, 1.442695
    %v397 = vpow.pop %v396
    %v398 = vmul.f32 %v368, 1.442695
    %v399 = vpow.pop %v398
    %v400 = vmul.f32 %v369, 1.442695
    %v401 = vpow.pop %v400
    %v402 = vsel %vm129, %v371, 0.0
    %403 = vadd.xlane.f32.xlu0 %v402
    %v404 = vpop.xlane.xlu0 %403
    %v405 = vsel %vm129, %v373, 0.0
    %406 = vadd.xlane.f32.xlu0 %v405
    %v407 = vpop.xlane.xlu0 %406
    %v408 = vsel %vm129, %v375, 0.0
    %409 = vadd.xlane.f32.xlu0 %v408
    %v410 = vpop.xlane.xlu0 %409
    %v411 = vsel %vm129, %v377, 0.0
    %412 = vadd.xlane.f32.xlu0 %v411
    %v413 = vpop.xlane.xlu0 %412
    %v414 = vsel %vm129, %v379, 0.0
    %415 = vadd.xlane.f32.xlu0 %v414
    %v416 = vpop.xlane.xlu0 %415
    %v417 = vsel %vm129, %v381, 0.0
    %418 = vadd.xlane.f32.xlu0 %v417
    %v419 = vpop.xlane.xlu0 %418
    %v420 = vsel %vm129, %v383, 0.0
    %421 = vadd.xlane.f32.xlu0 %v420
    %v422 = vpop.xlane.xlu0 %421
    %v423 = vsel %vm129, %v385, 0.0
    %424 = vadd.xlane.f32.xlu0 %v423
    %v425 = vpop.xlane.xlu0 %424
    %v426 = vsel %vm129, %v387, 0.0
    %427 = vadd.xlane.f32.xlu0 %v426
    %v428 = vpop.xlane.xlu0 %427
    %v429 = vsel %vm129, %v389, 0.0
    %430 = vadd.xlane.f32.xlu0 %v429
    %v431 = vpop.xlane.xlu0 %430
    %v432 = vsel %vm129, %v391, 0.0
    %433 = vadd.xlane.f32.xlu0 %v432
    %v434 = vpop.xlane.xlu0 %433
    %v435 = vsel %vm129, %v393, 0.0
    %436 = vadd.xlane.f32.xlu0 %v435
    %v437 = vpop.xlane.xlu0 %436
    %v438 = vsel %vm129, %v395, 0.0
    %439 = vadd.xlane.f32.xlu0 %v438
    %v440 = vpop.xlane.xlu0 %439
    %v441 = vsel %vm129, %v397, 0.0
    %442 = vadd.xlane.f32.xlu0 %v441
    %v443 = vpop.xlane.xlu0 %442
    %v444 = vsel %vm129, %v399, 0.0
    %445 = vadd.xlane.f32.xlu0 %v444
    %v446 = vpop.xlane.xlu0 %445
    %v447 = vsel %vm129, %v401, 0.0
    %448 = vadd.xlane.f32.xlu0 %v447
    %v449 = vpop.xlane.xlu0 %448
    %v450 = vsub.f32 %v354, %v178
    %v451 = vsub.f32 %v355, %v179
    %v452 = vsub.f32 %v356, %v180
    %v453 = vsub.f32 %v357, %v181
    %v454 = vsub.f32 %v358, %v182
    %v455 = vsub.f32 %v359, %v183
    %v456 = vsub.f32 %v360, %v184
    %v457 = vsub.f32 %v361, %v185
    %v458 = vsub.f32 %v362, %v186
    %v459 = vsub.f32 %v363, %v187
    %v460 = vsub.f32 %v364, %v188
    %v461 = vsub.f32 %v365, %v189
    %v462 = vsub.f32 %v366, %v190
    %v463 = vsub.f32 %v367, %v191
    %v464 = vsub.f32 %v368, %v192
    %v465 = vsub.f32 %v369, %v193
    %v466 = vmul.f32 %v371, %v450
    %v467 = vmul.f32 %v373, %v451
    %v468 = vmul.f32 %v375, %v452
    %v469 = vmul.f32 %v377, %v453
    %v470 = vmul.f32 %v379, %v454
    %v471 = vmul.f32 %v381, %v455
    %v472 = vmul.f32 %v383, %v456
    %v473 = vmul.f32 %v385, %v457
    %v474 = vmul.f32 %v387, %v458
    %v475 = vmul.f32 %v389, %v459
    %v476 = vmul.f32 %v391, %v460
    %v477 = vmul.f32 %v393, %v461
    %v478 = vmul.f32 %v395, %v462
    %v479 = vmul.f32 %v397, %v463
    %v480 = vmul.f32 %v399, %v464
    %v481 = vmul.f32 %v401, %v465
    %v482 = vsel %vm129, %v466, 0.0
    %483 = vadd.xlane.f32.xlu0 %v482
    %v484 = vpop.xlane.xlu0 %483
    %v485 = vsel %vm129, %v467, 0.0
    %486 = vadd.xlane.f32.xlu0 %v485
    %v487 = vpop.xlane.xlu0 %486
    %v488 = vsel %vm129, %v468, 0.0
    %489 = vadd.xlane.f32.xlu0 %v488
    %v490 = vpop.xlane.xlu0 %489
    %v491 = vsel %vm129, %v469, 0.0
    %492 = vadd.xlane.f32.xlu0 %v491
    %v493 = vpop.xlane.xlu0 %492
    %v494 = vsel %vm129, %v470, 0.0
    %495 = vadd.xlane.f32.xlu0 %v494
    %v496 = vpop.xlane.xlu0 %495
    %v497 = vsel %vm129, %v471, 0.0
    %498 = vadd.xlane.f32.xlu0 %v497
    %v499 = vpop.xlane.xlu0 %498
    %v500 = vsel %vm129, %v472, 0.0
    %501 = vadd.xlane.f32.xlu0 %v500
    %v502 = vpop.xlane.xlu0 %501
    %v503 = vsel %vm129, %v473, 0.0
    %504 = vadd.xlane.f32.xlu0 %v503
    %v505 = vpop.xlane.xlu0 %504
    %v506 = vsel %vm129, %v474, 0.0
    %507 = vadd.xlane.f32.xlu0 %v506
    %v508 = vpop.xlane.xlu0 %507
    %v509 = vsel %vm129, %v475, 0.0
    %510 = vadd.xlane.f32.xlu0 %v509
    %v511 = vpop.xlane.xlu0 %510
    %v512 = vsel %vm129, %v476, 0.0
    %513 = vadd.xlane.f32.xlu0 %v512
    %v514 = vpop.xlane.xlu0 %513
    %v515 = vsel %vm129, %v477, 0.0
    %516 = vadd.xlane.f32.xlu0 %v515
    %v517 = vpop.xlane.xlu0 %516
    %v518 = vsel %vm129, %v478, 0.0
    %519 = vadd.xlane.f32.xlu0 %v518
    %v520 = vpop.xlane.xlu0 %519
    %v521 = vsel %vm129, %v479, 0.0
    %522 = vadd.xlane.f32.xlu0 %v521
    %v523 = vpop.xlane.xlu0 %522
    %v524 = vsel %vm129, %v480, 0.0
    %525 = vadd.xlane.f32.xlu0 %v524
    %v526 = vpop.xlane.xlu0 %525
    %v527 = vsel %vm129, %v481, 0.0
    %528 = vadd.xlane.f32.xlu0 %v527
    %v529 = vpop.xlane.xlu0 %528
    %v530 = vrcp.pop %v404
    %v531 = vrcp.pop %v407
    %v532 = vrcp.pop %v410
    %v533 = vrcp.pop %v413
    %v534 = vrcp.pop %v416
    %v535 = vrcp.pop %v419
    %v536 = vrcp.pop %v422
    %v537 = vrcp.pop %v425
    %v538 = vrcp.pop %v428
    %v539 = vrcp.pop %v431
    %v540 = vrcp.pop %v434
    %v541 = vrcp.pop %v437
    %v542 = vrcp.pop %v440
    %v543 = vrcp.pop %v443
    %v544 = vrcp.pop %v446
    %v545 = vrcp.pop %v449
    %v546 = vmul.f32 %v484, %v530
    %v547 = vmul.f32 %v487, %v531
    %v548 = vmul.f32 %v490, %v532
    %v549 = vmul.f32 %v493, %v533
    %v550 = vmul.f32 %v496, %v534
    %v551 = vmul.f32 %v499, %v535
    %v552 = vmul.f32 %v502, %v536
    %v553 = vmul.f32 %v505, %v537
    %v554 = vmul.f32 %v508, %v538
    %v555 = vmul.f32 %v511, %v539
    %v556 = vmul.f32 %v514, %v540
    %v557 = vmul.f32 %v517, %v541
    %v558 = vmul.f32 %v520, %v542
    %v559 = vmul.f32 %v523, %v543
    %v560 = vmul.f32 %v526, %v544
    %v561 = vmul.f32 %v529, %v545
    %v562 = vlog2.pop %v404
    %v563 = vmul.f32 %v562, 0.6931472
    %v564 = vlog2.pop %v407
    %v565 = vmul.f32 %v564, 0.6931472
    %v566 = vlog2.pop %v410
    %v567 = vmul.f32 %v566, 0.6931472
    %v568 = vlog2.pop %v413
    %v569 = vmul.f32 %v568, 0.6931472
    %v570 = vlog2.pop %v416
    %v571 = vmul.f32 %v570, 0.6931472
    %v572 = vlog2.pop %v419
    %v573 = vmul.f32 %v572, 0.6931472
    %v574 = vlog2.pop %v422
    %v575 = vmul.f32 %v574, 0.6931472
    %v576 = vlog2.pop %v425
    %v577 = vmul.f32 %v576, 0.6931472
    %v578 = vlog2.pop %v428
    %v579 = vmul.f32 %v578, 0.6931472
    %v580 = vlog2.pop %v431
    %v581 = vmul.f32 %v580, 0.6931472
    %v582 = vlog2.pop %v434
    %v583 = vmul.f32 %v582, 0.6931472
    %v584 = vlog2.pop %v437
    %v585 = vmul.f32 %v584, 0.6931472
    %v586 = vlog2.pop %v440
    %v587 = vmul.f32 %v586, 0.6931472
    %v588 = vlog2.pop %v443
    %v589 = vmul.f32 %v588, 0.6931472
    %v590 = vlog2.pop %v446
    %v591 = vmul.f32 %v590, 0.6931472
    %v592 = vlog2.pop %v449
    %v593 = vmul.f32 %v592, 0.6931472
    %v594 = vsub.f32 %v275, %v563
    %v595 = vsub.f32 %v277, %v565
    %v596 = vsub.f32 %v279, %v567
    %v597 = vsub.f32 %v281, %v569
    %v598 = vsub.f32 %v283, %v571
    %v599 = vsub.f32 %v285, %v573
    %v600 = vsub.f32 %v287, %v575
    %v601 = vsub.f32 %v289, %v577
    %v602 = vsub.f32 %v291, %v579
    %v603 = vsub.f32 %v293, %v581
    %v604 = vsub.f32 %v295, %v583
    %v605 = vsub.f32 %v297, %v585
    %v606 = vsub.f32 %v299, %v587
    %v607 = vsub.f32 %v301, %v589
    %v608 = vsub.f32 %v303, %v591
    %v609 = vsub.f32 %v305, %v593
    %v610 = vadd.f32 %v546, %v594
    %v611 = vadd.f32 %v547, %v595
    %v612 = vadd.f32 %v548, %v596
    %v613 = vadd.f32 %v549, %v597
    %v614 = vadd.f32 %v550, %v598
    %v615 = vadd.f32 %v551, %v599
    %v616 = vadd.f32 %v552, %v600
    %v617 = vadd.f32 %v553, %v601
    %v618 = vadd.f32 %v554, %v602
    %v619 = vadd.f32 %v555, %v603
    %v620 = vadd.f32 %v556, %v604
    %v621 = vadd.f32 %v557, %v605
    %v622 = vadd.f32 %v558, %v606
    %v623 = vadd.f32 %v559, %v607
    %v624 = vadd.f32 %v560, %v608
    %v625 = vadd.f32 %v561, %v609
    %v626 = vld [vmem:[#allocation2] sm:$0xff]
    %v627 = vld [vmem:[#allocation2 + $0x8] sm:$0xff]
    %v628 = vld [vmem:[#allocation2 + $0x10] sm:$0xff]
    %v629 = vld [vmem:[#allocation2 + $0x18] sm:$0xff]
    %v630 = vld [vmem:[#allocation2 + $0x20] sm:$0xff]
    %v631 = vld [vmem:[#allocation2 + $0x28] sm:$0xff]
    %v632 = vld [vmem:[#allocation2 + $0x30] sm:$0xff]
    %v633 = vld [vmem:[#allocation2 + $0x38] sm:$0xff]
    %v634 = vld [vmem:[#allocation2 + $0x40] sm:$0xff]
    %v635 = vld [vmem:[#allocation2 + $0x48] sm:$0xff]
    %v636 = vld [vmem:[#allocation2 + $0x50] sm:$0xff]
    %v637 = vld [vmem:[#allocation2 + $0x58] sm:$0xff]
    %v638 = vld [vmem:[#allocation2 + $0x60] sm:$0xff]
    %v639 = vld [vmem:[#allocation2 + $0x68] sm:$0xff]
    %v640 = vld [vmem:[#allocation2 + $0x70] sm:$0xff]
    %v641 = vld [vmem:[#allocation2 + $0x78] sm:$0xff]
    %v642 = vadd.f32 %v626, %v610
    %v643 = vadd.f32 %v627, %v611
    %v644 = vadd.f32 %v628, %v612
    %v645 = vadd.f32 %v629, %v613
    %v646 = vadd.f32 %v630, %v614
    %v647 = vadd.f32 %v631, %v615
    %v648 = vadd.f32 %v632, %v616
    %v649 = vadd.f32 %v633, %v617
    %v650 = vadd.f32 %v634, %v618
    %v651 = vadd.f32 %v635, %v619
    %v652 = vadd.f32 %v636, %v620
    %v653 = vadd.f32 %v637, %v621
    %v654 = vadd.f32 %v638, %v622
    %v655 = vadd.f32 %v639, %v623
    %v656 = vadd.f32 %v640, %v624
    %v657 = vadd.f32 %v641, %v625
    %vm658 = vcmask 7168
    %659 = vst.msk [vmem:[#allocation2] sm:$0xff] %vm658, %v642
    %660 = vst.msk [vmem:[#allocation2 + $0x8] sm:$0xff] %vm658, %v643
    %661 = vst.msk [vmem:[#allocation2 + $0x10] sm:$0xff] %vm658, %v644
    %662 = vst.msk [vmem:[#allocation2 + $0x18] sm:$0xff] %vm658, %v645
    %663 = vst.msk [vmem:[#allocation2 + $0x20] sm:$0xff] %vm658, %v646
    %664 = vst.msk [vmem:[#allocation2 + $0x28] sm:$0xff] %vm658, %v647
    %665 = vst.msk [vmem:[#allocation2 + $0x30] sm:$0xff] %vm658, %v648
    %666 = vst.msk [vmem:[#allocation2 + $0x38] sm:$0xff] %vm658, %v649
    %667 = vst.msk [vmem:[#allocation2 + $0x40] sm:$0xff] %vm658, %v650
    %668 = vst.msk [vmem:[#allocation2 + $0x48] sm:$0xff] %vm658, %v651
    %669 = vst.msk [vmem:[#allocation2 + $0x50] sm:$0xff] %vm658, %v652
    %670 = vst.msk [vmem:[#allocation2 + $0x58] sm:$0xff] %vm658, %v653
    %671 = vst.msk [vmem:[#allocation2 + $0x60] sm:$0xff] %vm658, %v654
    %672 = vst.msk [vmem:[#allocation2 + $0x68] sm:$0xff] %vm658, %v655
    %673 = vst.msk [vmem:[#allocation2 + $0x70] sm:$0xff] %vm658, %v656
    %674 = vst.msk [vmem:[#allocation2 + $0x78] sm:$0xff] %vm658, %v657
    // Predicated region
    $region14: #{tpu_custom_call.1} parent=1 // pred_check
      %p675 = pneg %p76
    $region15: #{tpu_custom_call.1} parent=1 // pred_check_branch
      %677 = sbr.rel (%p675) target = $region17
    $region16: #{tpu_custom_call.1} parent=1 // pred_region
      %v678 = vld [vmem:[#allocation2] sm:$0xff]
      %v679 = vld [vmem:[#allocation2 + $0x8] sm:$0xff]
      %v680 = vld [vmem:[#allocation2 + $0x10] sm:$0xff]
      %v681 = vld [vmem:[#allocation2 + $0x18] sm:$0xff]
      %v682 = vld [vmem:[#allocation2 + $0x20] sm:$0xff]
      %v683 = vld [vmem:[#allocation2 + $0x28] sm:$0xff]
      %v684 = vld [vmem:[#allocation2 + $0x30] sm:$0xff]
      %v685 = vld [vmem:[#allocation2 + $0x38] sm:$0xff]
      %v686 = vld [vmem:[#allocation2 + $0x40] sm:$0xff]
      %v687 = vld [vmem:[#allocation2 + $0x48] sm:$0xff]
      %v688 = vld [vmem:[#allocation2 + $0x50] sm:$0xff]
      %v689 = vld [vmem:[#allocation2 + $0x58] sm:$0xff]
      %v690 = vld [vmem:[#allocation2 + $0x60] sm:$0xff]
      %v691 = vld [vmem:[#allocation2 + $0x68] sm:$0xff]
      %v692 = vld [vmem:[#allocation2 + $0x70] sm:$0xff]
      %v693 = vld [vmem:[#allocation2 + $0x78] sm:$0xff]
      %v694 = vsel %vm658, %v678, 0.0
      %v695 = vsel %vm658, %v679, 0.0
      %v696 = vadd.f32 %v694, %v695
      %v697 = vsel %vm658, %v680, 0.0
      %v698 = vadd.f32 %v696, %v697
      %v699 = vsel %vm658, %v681, 0.0
      %v700 = vadd.f32 %v698, %v699
      %v701 = vsel %vm658, %v682, 0.0
      %v702 = vadd.f32 %v700, %v701
      %v703 = vsel %vm658, %v683, 0.0
      %v704 = vadd.f32 %v702, %v703
      %v705 = vsel %vm658, %v684, 0.0
      %v706 = vadd.f32 %v704, %v705
      %v707 = vsel %vm658, %v685, 0.0
      %v708 = vadd.f32 %v706, %v707
      %v709 = vsel %vm658, %v686, 0.0
      %v710 = vadd.f32 %v708, %v709
      %v711 = vsel %vm658, %v687, 0.0
      %v712 = vadd.f32 %v710, %v711
      %v713 = vsel %vm658, %v688, 0.0
      %v714 = vadd.f32 %v712, %v713
      %v715 = vsel %vm658, %v689, 0.0
      %v716 = vadd.f32 %v714, %v715
      %v717 = vsel %vm658, %v690, 0.0
      %v718 = vadd.f32 %v716, %v717
      %v719 = vsel %vm658, %v691, 0.0
      %v720 = vadd.f32 %v718, %v719
      %v721 = vsel %vm658, %v692, 0.0
      %v722 = vadd.f32 %v720, %v721
      %v723 = vsel %vm658, %v693, 0.0
      %v724 = vadd.f32 %v722, %v723
      %725 = vadd.xlane.f32.xlu0 %v724
      %v726 = vpop.xlane.xlu0 %725
      %v727 = vrot.slane %v726, 4
      %v728 = vadd.f32 %v726, %v727
      %v729 = vrot.slane %v728, 2
      %v730 = vadd.f32 %v728, %v729
      %v731 = vrot.slane %v730, 1
      %v732 = vadd.f32 %v730, %v731
      %s733 = vtos %v732
      %v734 = vstv %s733
      %735 = vst [vmem:[#allocation3] sm:$0xff] %v734
    $region17: #{tpu_custom_call.1} parent=1 // pred_fallthru
      _
    // Predicated region
    $region18: #{tpu_custom_call.1} parent=1 // pred_check
      _
    $region19: #{tpu_custom_call.1} parent=1 // pred_check_branch
      %737 = sbr.rel (0) target = $region21
    $region20: #{tpu_custom_call.1} parent=1 // pred_region
      %s739 = ssub.s32 128, 128
      %740 = vsyncadd [#allocation4], %s739
      %s742 = sshll.u32 [#allocation3], 4
      %s743 = int_to_ptr.vmem [resolvable:$true] %s742
      %745 = dma.vmem_to_hbm [thread:$0]  %s743, 128, %s2, [#allocation4]
    $region21: #{tpu_custom_call.1} parent=1 // pred_fallthru
      _
    // Predicated region
    $region22: #{tpu_custom_call.1} parent=1 // pred_check
      _
    $region23: #{tpu_custom_call.1} parent=1 // pred_check_branch
      %747 = sbr.rel (0) target = $region25
    $region24: #{tpu_custom_call.1} parent=1 // pred_region
      %748 = dma.done [#allocation4], 128
    $region25: #{tpu_custom_call.1} parent=1 // pred_fallthru
      _
    %749 = vsyncpa [#allocation4], 1

</llo_original>
